<compile_context>
chip_gen: v5e
topology: v5e:2x2
jax: 0.10.0
libtpu: 0.0.40
codegen_flags: <defaults>
</compile_context>

<pallas_src>
import functools
import math

import jax
import jax.numpy as jnp
from jax import lax
from jax.experimental import pallas as pl
from jax.experimental.pallas import tpu as pltpu


def _embedding_kernel(noise_ref, freqs_ref, w1t_ref, b1_ref, w2t_ref, b2_ref,
                      o_ref, *, half):
    # Positional embedding: phase = t * freqs with freqs tiled [f | f]; select
    # cos for the first half of the lanes and sin for the second half.  This
    # keeps layer 1 as a single (bm, C) @ (C, H) MXU matmul (no concat, no
    # split halves, no host-side padding).
    t = noise_ref[...].astype(jnp.float32)                    # (bm, 1)
    phase = t * freqs_ref[...]                                # (bm, C) f32
    col = lax.broadcasted_iota(jnp.int32, phase.shape, 1)
    pos = jnp.where(col < half, jnp.cos(phase), jnp.sin(phase))

    # Layer 1: bf16 MXU inputs, f32 accumulation, f32 epilogue.
    h = jnp.dot(pos.astype(jnp.bfloat16), w1t_ref[...],
                preferred_element_type=jnp.float32)
    h = h + b1_ref[...]
    h = h * pl.reciprocal(1.0 + jnp.exp(-h), approx=True)     # SiLU (EUP recip)

    # Layer 2: same recipe.
    y = jnp.dot(h.astype(jnp.bfloat16), w2t_ref[...],
                preferred_element_type=jnp.float32)
    y = y + b2_ref[...]
    y = y * pl.reciprocal(1.0 + jnp.exp(-y), approx=True)     # SiLU

    o_ref[...] = y.astype(o_ref.dtype)


def prepare_embedding_params(w1, b1, w2, b2, *, max_positions=10000,
                             endpoint=False):
    """One-time host-side weight prep (hoisted out of the per-call path).

    w1: (hidden, noise_dim), b1: (hidden,) or None
    w2: (hidden, hidden),    b2: (hidden,) or None
    Returns a dict of kernel-ready (bf16 weight / f32 bias) tensors.
    """
    H, C = w1.shape
    if C % 2 != 0:
        raise ValueError("noise_dim must be even")
    if w2.shape != (H, H):
        raise ValueError("w2 must have shape (hidden, hidden)")
    half = C // 2

    freqs = jnp.arange(half, dtype=jnp.float32)
    denom = max(half - (1 if endpoint else 0), 1)     # guard half==1, endpoint
    freqs = (1.0 / max_positions) ** (freqs / denom)
    freqs2 = jnp.concatenate([freqs, freqs]).reshape(1, C)     # [f | f]

    w1t = jnp.asarray(w1, jnp.float32).T.astype(jnp.bfloat16)  # (C, H) bf16
    w2t = jnp.asarray(w2, jnp.float32).T.astype(jnp.bfloat16)  # (H, H) bf16
    b1r = (jnp.zeros((H,), jnp.float32) if b1 is None
           else jnp.asarray(b1, jnp.float32)).reshape(1, H)
    b2r = (jnp.zeros((H,), jnp.float32) if b2 is None
           else jnp.asarray(b2, jnp.float32)).reshape(1, H)
    return dict(freqs=freqs2, w1t=w1t, b1=b1r, w2t=w2t, b2=b2r,
                half=half, hidden=H, noise_dim=C)


def embedding_forward(noise_level, params, *, block_m=1024, out_dtype=None):
    """Fused Pallas forward of the PyTorch `Embedding` module."""
    if noise_level.ndim != 1:
        raise ValueError("noise_level must be a 1-D vector of noise levels")
    B = noise_level.shape[0]
    H, C, half = params["hidden"], params["noise_dim"], params["half"]
    out_dtype = noise_level.dtype if out_dtype is None else jnp.dtype(out_dtype)
    o_size = jnp.dtype(out_dtype).itemsize

    # Batch tile: big enough to amortize the ~0.35 us/step pipeline cost and
    # issue large lane-dense output DMAs, but capped so the grid has >= 2
    # blocks whenever the batch allows (v7x has two TensorCores to feed; the
    # extra grid step is negligible on single-core v5e/v6e).
    sub = 16 if o_size == 2 else 8
    ceil_b = -(-B // sub) * sub
    bm = min(int(block_m), ceil_b)
    if ceil_b > sub:
        bm = min(bm, -(-pl.cdiv(B, 2) // sub) * sub)
    bm = max(sub, (bm // sub) * sub)
    grid = (pl.cdiv(B, bm),)

    noise2d = noise_level.reshape(B, 1)

    cost = pl.CostEstimate(
        flops=2 * B * (C * H + H * H),
        transcendentals=B * (2 * C + 4 * H),
        bytes_accessed=int(B * 4 + B * H * o_size
                           + 2 * (C * H + H * H) + 4 * (2 * H + C)),
    )
    # Explicit VMEM budget with headroom over the real footprint.
    resident = 2 * (C * H * 2 + H * H * 2 + 2 * H * 4 + C * 4)   # dbl-buffered weights
    per_step = 2 * (bm * 4 + bm * H * o_size)                    # dbl-buffered I/O
    temps = bm * C * 4 + 4 * bm * H * 4                          # live in-kernel values
    vmem_limit = int(min(64 * 1024 * 1024,
                         max(32 * 1024 * 1024,
                             2 * (resident + per_step + temps))))

    kernel = functools.partial(_embedding_kernel, half=half)
    return pl.pallas_call(
        kernel,
        out_shape=jax.ShapeDtypeStruct((B, H), out_dtype),
        grid=grid,
        in_specs=[
            pl.BlockSpec((bm, 1), lambda i: (i, 0)),    # noise levels (tiled)
            pl.BlockSpec((1, C), lambda i: (0, 0)),     # freqs [f|f] (resident)
            pl.BlockSpec((C, H), lambda i: (0, 0)),     # W1^T bf16 (resident)
            pl.BlockSpec((1, H), lambda i: (0, 0)),     # b1 f32
            pl.BlockSpec((H, H), lambda i: (0, 0)),     # W2^T bf16 (resident)
            pl.BlockSpec((1, H), lambda i: (0, 0)),     # b2 f32
        ],
        out_specs=pl.BlockSpec((bm, H), lambda i: (i, 0)),  # lane-dense output
        compiler_params=pltpu.CompilerParams(
            dimension_semantics=("parallel",),
            vmem_limit_bytes=vmem_limit),
        cost_estimate=cost,
    )(noise2d, params["freqs"], params["w1t"], params["b1"],
      params["w2t"], params["b2"])


def _embedding_ref(noise, w1, b1, w2, b2, max_positions=10000, endpoint=False):
    """Pure-JAX f32 reference matching the PyTorch forward."""
    half = w1.shape[1] // 2
    freqs = jnp.arange(half, dtype=jnp.float32)
    freqs = freqs / (half - (1 if endpoint else 0))
    freqs = (1.0 / max_positions) ** freqs
    x = noise[:, None] * freqs[None, :]
    x = jnp.concatenate([jnp.cos(x), jnp.sin(x)], axis=1)
    x = x @ w1.T + (0.0 if b1 is None else b1)
    x = x * (1.0 / (1.0 + jnp.exp(-x)))
    x = x @ w2.T + (0.0 if b2 is None else b2)
    x = x * (1.0 / (1.0 + jnp.exp(-x)))
    return x


if __name__ == "__main__":
    key = jax.random.PRNGKey(0)
    k1, k2, k3, k4, k5 = jax.random.split(key, 5)

    B, noise_dim, hidden_dim = 16, 64, 128
    noise_level = jax.random.uniform(k1, (B,), dtype=jnp.float32) * 100.0

    # Kaiming-uniform-ish init consistent with the reference module's Linear.
    bound1 = 1.0 / math.sqrt(noise_dim)
    w1 = jax.random.uniform(k2, (hidden_dim, noise_dim), jnp.float32, -bound1, bound1)
    b1 = jax.random.uniform(k3, (hidden_dim,), jnp.float32, -bound1, bound1)
    bound2 = 1.0 / math.sqrt(hidden_dim)
    w2 = jax.random.uniform(k4, (hidden_dim, hidden_dim), jnp.float32, -bound2, bound2)
    b2 = jax.random.uniform(k5, (hidden_dim,), jnp.float32, -bound2, bound2)

    # One-time prep (hoisted); then run the fused kernel.
    params = prepare_embedding_params(w1, b1, w2, b2)
    y = embedding_forward(noise_level, params)
    y = jax.block_until_ready(y)

    y_ref = jax.block_until_ready(_embedding_ref(noise_level, w1, b1, w2, b2))

    assert y.shape == (B, hidden_dim) and y.dtype == noise_level.dtype
    max_err = float(jnp.max(jnp.abs(y - y_ref)))
    assert bool(jnp.allclose(y, y_ref, rtol=2e-2, atol=2e-2)), \
        f"kernel/reference mismatch, max abs err = {max_err}"

    print("KERNEL_OK")
</pallas_src>

<mosaic_0001>
module attributes {stable_mosaic.version = 11 : i64} {
  func.func @_embedding_kernel(%arg0: i32, %arg1: memref<8x1xf32, #tpu.memory_space<vmem>>, %arg2: memref<1x64xf32, #tpu.memory_space<vmem>>, %arg3: memref<64x128xbf16, #tpu.memory_space<vmem>>, %arg4: memref<1x128xf32, #tpu.memory_space<vmem>>, %arg5: memref<128x128xbf16, #tpu.memory_space<vmem>>, %arg6: memref<1x128xf32, #tpu.memory_space<vmem>>, %arg7: memref<8x128xf32, #tpu.memory_space<vmem>>) attributes {dimension_semantics = [#tpu.dimension_semantics<parallel>], iteration_bounds = array<i64: 2>, scalar_prefetch = 0 : i64, scratch_operands = 0 : i64, tpu.core_type = #tpu.core_type<tc>, window_params = [{transform_indices = @transform_0, window_bounds = array<i64: 8, 1>}, {pipeline_mode = #tpu.pipeline_mode<synchronous>, transform_indices = @transform_1, window_bounds = array<i64: 1, 64>}, {pipeline_mode = #tpu.pipeline_mode<synchronous>, transform_indices = @transform_2, window_bounds = array<i64: 64, 128>}, {pipeline_mode = #tpu.pipeline_mode<synchronous>, transform_indices = @transform_3, window_bounds = array<i64: 1, 128>}, {pipeline_mode = #tpu.pipeline_mode<synchronous>, transform_indices = @transform_4, window_bounds = array<i64: 128, 128>}, {pipeline_mode = #tpu.pipeline_mode<synchronous>, transform_indices = @transform_5, window_bounds = array<i64: 1, 128>}, {transform_indices = @transform_6, window_bounds = array<i64: 8, 128>}]} {
    %c0 = arith.constant 0 : index
    %c0_0 = arith.constant 0 : index
    %0 = vector.load %arg1[%c0, %c0_0] : memref<8x1xf32, #tpu.memory_space<vmem>>, vector<8x1xf32>
    %c0_1 = arith.constant 0 : index
    %c0_2 = arith.constant 0 : index
    %1 = vector.load %arg2[%c0_1, %c0_2] : memref<1x64xf32, #tpu.memory_space<vmem>>, vector<1x64xf32>
    %2 = vector.broadcast %0 : vector<8x1xf32> to vector<8x64xf32>
    %3 = vector.broadcast %1 : vector<1x64xf32> to vector<8x64xf32>
    %4 = arith.mulf %2, %3 : vector<8x64xf32>
    %5 = tpu.iota {dimensions = array<i32: 1>} : vector<8x64xi32>
    %c32_i32 = arith.constant 32 : i32
    %6 = vector.broadcast %c32_i32 : i32 to vector<8x64xi32>
    %7 = arith.cmpi slt, %5, %6 : vector<8x64xi32>
    %8 = math.cos %4 : vector<8x64xf32>
    %9 = math.sin %4 : vector<8x64xf32>
    %10 = arith.select %7, %8, %9 : vector<8x64xi1>, vector<8x64xf32>
    %11 = arith.truncf %10 : vector<8x64xf32> to vector<8x64xbf16>
    %c0_3 = arith.constant 0 : index
    %c0_4 = arith.constant 0 : index
    %12 = vector.load %arg3[%c0_3, %c0_4] : memref<64x128xbf16, #tpu.memory_space<vmem>>, vector<64x128xbf16>
    %cst = arith.constant dense<0.000000e+00> : vector<8x128xf32>
    %13 = tpu.matmul %11, %12, %cst {dimension_numbers = #tpu.dot_dimension_numbers<[1], [0], [0], [1], [0, 0, 1, 1], [], []>} : vector<8x64xbf16>, vector<64x128xbf16>, vector<8x128xf32> -> vector<8x128xf32>
    %c0_5 = arith.constant 0 : index
    %c0_6 = arith.constant 0 : index
    %14 = vector.load %arg4[%c0_5, %c0_6] : memref<1x128xf32, #tpu.memory_space<vmem>>, vector<1x128xf32>
    %15 = vector.broadcast %14 : vector<1x128xf32> to vector<8x128xf32>
    %16 = arith.addf %13, %15 : vector<8x128xf32>
    %cst_7 = arith.constant 0.000000e+00 : f32
    %17 = vector.broadcast %cst_7 : f32 to vector<8x128xf32>
    %18 = arith.subf %17, %16 : vector<8x128xf32>
    %19 = math.exp %18 : vector<8x128xf32>
    %cst_8 = arith.constant 1.000000e+00 : f32
    %20 = vector.broadcast %cst_8 : f32 to vector<8x128xf32>
    %21 = arith.addf %20, %19 : vector<8x128xf32>
    %22 = tpu.reciprocal %21 {approx = true} : vector<8x128xf32> -> vector<8x128xf32>
    %23 = arith.mulf %16, %22 : vector<8x128xf32>
    %24 = arith.truncf %23 : vector<8x128xf32> to vector<8x128xbf16>
    %c0_9 = arith.constant 0 : index
    %c0_10 = arith.constant 0 : index
    %25 = vector.load %arg5[%c0_9, %c0_10] : memref<128x128xbf16, #tpu.memory_space<vmem>>, vector<128x128xbf16>
    %cst_11 = arith.constant dense<0.000000e+00> : vector<8x128xf32>
    %26 = tpu.matmul %24, %25, %cst_11 {dimension_numbers = #tpu.dot_dimension_numbers<[1], [0], [0], [1], [0, 0, 1, 1], [], []>} : vector<8x128xbf16>, vector<128x128xbf16>, vector<8x128xf32> -> vector<8x128xf32>
    %c0_12 = arith.constant 0 : index
    %c0_13 = arith.constant 0 : index
    %27 = vector.load %arg6[%c0_12, %c0_13] : memref<1x128xf32, #tpu.memory_space<vmem>>, vector<1x128xf32>
    %28 = vector.broadcast %27 : vector<1x128xf32> to vector<8x128xf32>
    %29 = arith.addf %26, %28 : vector<8x128xf32>
    %cst_14 = arith.constant 0.000000e+00 : f32
    %30 = vector.broadcast %cst_14 : f32 to vector<8x128xf32>
    %31 = arith.subf %30, %29 : vector<8x128xf32>
    %32 = math.exp %31 : vector<8x128xf32>
    %cst_15 = arith.constant 1.000000e+00 : f32
    %33 = vector.broadcast %cst_15 : f32 to vector<8x128xf32>
    %34 = arith.addf %33, %32 : vector<8x128xf32>
    %35 = tpu.reciprocal %34 {approx = true} : vector<8x128xf32> -> vector<8x128xf32>
    %36 = arith.mulf %29, %35 : vector<8x128xf32>
    %c0_16 = arith.constant 0 : index
    %c0_17 = arith.constant 0 : index
    %37 = vector.load %arg7[%c0_16, %c0_17] : memref<8x128xf32, #tpu.memory_space<vmem>>, vector<8x128xf32>
    tpu.vector_store %arg7[%c0_16, %c0_17], %36 {strides = array<i32>} : memref<8x128xf32, #tpu.memory_space<vmem>>, vector<8x128xf32>,
    return
  }
  func.func @transform_0(%arg0: i32) -> (i32, i32) {
    %c0_i32 = arith.constant 0 : i32
    %c0_i32_0 = arith.constant 0 : i32
    return %arg0, %c0_i32 : i32, i32
  }
  func.func @transform_1(%arg0: i32) -> (i32, i32) {
    %c0_i32 = arith.constant 0 : i32
    %c0_i32_0 = arith.constant 0 : i32
    %c0_i32_1 = arith.constant 0 : i32
    return %c0_i32, %c0_i32_0 : i32, i32
  }
  func.func @transform_2(%arg0: i32) -> (i32, i32) {
    %c0_i32 = arith.constant 0 : i32
    %c0_i32_0 = arith.constant 0 : i32
    %c0_i32_1 = arith.constant 0 : i32
    return %c0_i32, %c0_i32_0 : i32, i32
  }
  func.func @transform_3(%arg0: i32) -> (i32, i32) {
    %c0_i32 = arith.constant 0 : i32
    %c0_i32_0 = arith.constant 0 : i32
    %c0_i32_1 = arith.constant 0 : i32
    return %c0_i32, %c0_i32_0 : i32, i32
  }
  func.func @transform_4(%arg0: i32) -> (i32, i32) {
    %c0_i32 = arith.constant 0 : i32
    %c0_i32_0 = arith.constant 0 : i32
    %c0_i32_1 = arith.constant 0 : i32
    return %c0_i32, %c0_i32_0 : i32, i32
  }
  func.func @transform_5(%arg0: i32) -> (i32, i32) {
    %c0_i32 = arith.constant 0 : i32
    %c0_i32_0 = arith.constant 0 : i32
    %c0_i32_1 = arith.constant 0 : i32
    return %c0_i32, %c0_i32_0 : i32, i32
  }
  func.func @transform_6(%arg0: i32) -> (i32, i32) {
    %c0_i32 = arith.constant 0 : i32
    %c0_i32_0 = arith.constant 0 : i32
    return %arg0, %c0_i32 : i32, i32
  }
}

</mosaic_0001>

<llo_original>
// kernel: tpu_custom_call.1
$region0: #{tpu_custom_call.1}
  #allocation0 [shape = 'u32[]', space=smem, size = 0x4, offset = 0x4, fixed_abs, tag = 'smem constant byte address 0x4 - core index']
  #allocation1 [shape = 'u32[72,128]{1,0:T(1,128)}', space=vmem, size = 0x9000, scoped, tag = 'internal scratch']
  %s0 = inlined_call_operand.vmem [shape: f32[16,1], index: 0, kind: input, shape index: {}]
  %s1 = inlined_call_operand.vmem [shape: f32[1,64], index: 1, kind: input, shape index: {}]
  %s2 = inlined_call_operand.hbm [shape: bf16[64,128], index: 2, kind: input, shape index: {}]
  %s3 = inlined_call_operand.vmem [shape: f32[1,128], index: 3, kind: input, shape index: {}]
  %s4 = inlined_call_operand.hbm [shape: bf16[128,128], index: 4, kind: input, shape index: {}]
  %s5 = inlined_call_operand.vmem [shape: f32[1,128], index: 5, kind: input, shape index: {}]
  %s6 = inlined_call_operand.hbm [shape: f32[16,128], index: 6, kind: output, shape index: {}]
  %s7 = sld [smem:[#allocation0]]
  $region65: #{tpu_custom_call.1} parent=0
    _
  %s9 = ssub.s32 1, %s7
  %s10 = scalar_select 0, %s9, %s7
  $region1: #{tpu_custom_call.1} parent=0
    #allocation2 [shape = 'u8[16384]{0}', space=vmem, size = 0x4000, scoped, tag = 'input window, operand 2, single buffered']
    #allocation3 [shape = 's32[2]{0}', space=sflag, size = 0x8, scoped, tag = 'scoped memory for tpu_custom_call.1']
    #allocation4 [shape = 's32[2]{0}', space=sflag, size = 0x8, scoped, tag = 'scoped memory for tpu_custom_call.1']
    #allocation5 [shape = 'u8[32768]{0}', space=vmem, size = 0x8000, scoped, tag = 'input window, operand 4, single buffered']
    #allocation6 [shape = 's32[1]{0}', space=sflag, size = 0x4, scoped, tag = 'scoped memory for tpu_custom_call.1']
    #allocation7 [shape = 'u8[8192]{0}', space=vmem, size = 0x2000, scoped, tag = 'output window, operand 0']
    %11 = vsyncpa [#allocation3], 0
    %12 = vsyncpa [#allocation6], 0
    %13 = vsyncpa [#allocation4], 0
    %s14 = scalar_lea.sflag [#allocation4], 1
    %15 = vsyncpa %s14, 0
    loop: start=0, step=1, limit=4
    $region2: #{tpu_custom_call.1} parent=1 // loop_pre_header
      _
    $region3: #{tpu_custom_call.1} parent=1 // loop_header
      %s17 = sphi 0, %s21
      %p18 = scmp.ge.s32.totalorder %s17, 4
      %s27 = sphi 0, %s29
      %s30 = sphi 0, %s27
      %s31 = sphi 0, %s30
      %s47 = sphi 0, %s31
      %s51 = sphi 0, %s51
      %s53 = sphi 0, %s51
      %s54 = sphi 0, %s53
      %s68 = sphi 0, %s54
      %s72 = sphi 0, %s72
      %s74 = sphi 0, %s72
      %s75 = sphi 0, %s74
      %s89 = sphi 0, %s75
      %s93 = sphi 0, %s93
      %s95 = sphi 0, %s93
      %s96 = sphi 0, %s95
      %s110 = sphi 0, %s96
      %s114 = sphi 0, %s114
      %s116 = sphi 0, %s114
      %s117 = sphi 0, %s116
      %s131 = sphi 0, %s117
      %s135 = sphi 0, %s135
      %s137 = sphi 0, %s135
      %s138 = sphi 0, %s137
      %s152 = sphi 0, %s138
      %s158 = sphi 0, %s160
      %s161 = sphi 0, %s158
      %s162 = sphi 0, %s161
      %s178 = sphi 0, %s162
    $region4: #{tpu_custom_call.1} parent=1 // loop_header_branch
      %20 = sbr.rel (%p18) target = $region8
    $region5: #{tpu_custom_call.1} parent=1 // loop_body
      %s22 = ssub.s32 %s17, 1
      %s23 = ssub.s32 %s17, 2
      %s24 = sadd.s32 %s17, 1
      %s25 = ssub.s32 %s17, %s24
      %p26 = scmp.eq.s32.totalorder %s25, 0
      %s28 = sadd.s32 %s27, 1
      %s29 = scalar_select %p26, %s27, %s28
      %p32 = pneg %p26
      %p33 = scmp.eq.s32.totalorder %s17, 1
      %p34 = por %p32, %p33
      %p35 = scmp.ne.s32.totalorder %s27, %s30
      %p36 = scmp.eq.s32.totalorder %s17, 0
      %p37 = por %p35, %p36
      %p38 = scmp.ne.s32.totalorder %s27, %s30
      %p39 = scmp.eq.s32.totalorder %s22, 1
      %p40 = por %p38, %p39
      %p41 = scmp.ne.s32.totalorder %s30, %s31
      %p42 = scmp.eq.s32.totalorder %s22, 0
      %p43 = por %p41, %p42
      %p44 = scmp.ne.s32.totalorder %s30, %s31
      %p45 = scmp.eq.s32.totalorder %s23, 1
      %p46 = por %p44, %p45
      %p48 = scmp.ne.s32.totalorder %s31, %s47
      %p49 = scmp.eq.s32.totalorder %s23, 0
      %p50 = por %p48, %p49
      %s52 = sadd.s32 %s51, 1
      %p55 = scmp.eq.s32.totalorder %s17, 1
      %p56 = scmp.ne.s32.totalorder %s51, %s53
      %p57 = scmp.eq.s32.totalorder %s17, 0
      %p58 = por %p56, %p57
      %p59 = scmp.ne.s32.totalorder %s51, %s53
      %p60 = scmp.eq.s32.totalorder %s22, 1
      %p61 = por %p59, %p60
      %p62 = scmp.ne.s32.totalorder %s53, %s54
      %p63 = scmp.eq.s32.totalorder %s22, 0
      %p64 = por %p62, %p63
      %p65 = scmp.ne.s32.totalorder %s53, %s54
      %p66 = scmp.eq.s32.totalorder %s23, 1
      %p67 = por %p65, %p66
      %p69 = scmp.ne.s32.totalorder %s54, %s68
      %p70 = scmp.eq.s32.totalorder %s23, 0
      %p71 = por %p69, %p70
      %s73 = sadd.s32 %s72, 1
      %p76 = scmp.eq.s32.totalorder %s17, 1
      %p77 = scmp.ne.s32.totalorder %s72, %s74
      %p78 = scmp.eq.s32.totalorder %s17, 0
      %p79 = por %p77, %p78
      %p80 = scmp.ne.s32.totalorder %s72, %s74
      %p81 = scmp.eq.s32.totalorder %s22, 1
      %p82 = por %p80, %p81
      %p83 = scmp.ne.s32.totalorder %s74, %s75
      %p84 = scmp.eq.s32.totalorder %s22, 0
      %p85 = por %p83, %p84
      %p86 = scmp.ne.s32.totalorder %s74, %s75
      %p87 = scmp.eq.s32.totalorder %s23, 1
      %p88 = por %p86, %p87
      %p90 = scmp.ne.s32.totalorder %s75, %s89
      %p91 = scmp.eq.s32.totalorder %s23, 0
      %p92 = por %p90, %p91
      %s94 = sadd.s32 %s93, 1
      %p97 = scmp.eq.s32.totalorder %s17, 1
      %p98 = scmp.ne.s32.totalorder %s93, %s95
      %p99 = scmp.eq.s32.totalorder %s17, 0
      %p100 = por %p98, %p99
      %p101 = scmp.ne.s32.totalorder %s93, %s95
      %p102 = scmp.eq.s32.totalorder %s22, 1
      %p103 = por %p101, %p102
      %p104 = scmp.ne.s32.totalorder %s95, %s96
      %p105 = scmp.eq.s32.totalorder %s22, 0
      %p106 = por %p104, %p105
      %p107 = scmp.ne.s32.totalorder %s95, %s96
      %p108 = scmp.eq.s32.totalorder %s23, 1
      %p109 = por %p107, %p108
      %p111 = scmp.ne.s32.totalorder %s96, %s110
      %p112 = scmp.eq.s32.totalorder %s23, 0
      %p113 = por %p111, %p112
      %s115 = sadd.s32 %s114, 1
      %p118 = scmp.eq.s32.totalorder %s17, 1
      %p119 = scmp.ne.s32.totalorder %s114, %s116
      %p120 = scmp.eq.s32.totalorder %s17, 0
      %p121 = por %p119, %p120
      %p122 = scmp.ne.s32.totalorder %s114, %s116
      %p123 = scmp.eq.s32.totalorder %s22, 1
      %p124 = por %p122, %p123
      %p125 = scmp.ne.s32.totalorder %s116, %s117
      %p126 = scmp.eq.s32.totalorder %s22, 0
      %p127 = por %p125, %p126
      %p128 = scmp.ne.s32.totalorder %s116, %s117
      %p129 = scmp.eq.s32.totalorder %s23, 1
      %p130 = por %p128, %p129
      %p132 = scmp.ne.s32.totalorder %s117, %s131
      %p133 = scmp.eq.s32.totalorder %s23, 0
      %p134 = por %p132, %p133
      %s136 = sadd.s32 %s135, 1
      %p139 = scmp.eq.s32.totalorder %s17, 1
      %p140 = scmp.ne.s32.totalorder %s135, %s137
      %p141 = scmp.eq.s32.totalorder %s17, 0
      %p142 = por %p140, %p141
      %p143 = scmp.ne.s32.totalorder %s135, %s137
      %p144 = scmp.eq.s32.totalorder %s22, 1
      %p145 = por %p143, %p144
      %p146 = scmp.ne.s32.totalorder %s137, %s138
      %p147 = scmp.eq.s32.totalorder %s22, 0
      %p148 = por %p146, %p147
      %p149 = scmp.ne.s32.totalorder %s137, %s138
      %p150 = scmp.eq.s32.totalorder %s23, 1
      %p151 = por %p149, %p150
      %p153 = scmp.ne.s32.totalorder %s138, %s152
      %p154 = scmp.eq.s32.totalorder %s23, 0
      %p155 = por %p153, %p154
      %s156 = ssub.s32 %s17, %s24
      %p157 = scmp.eq.s32.totalorder %s156, 0
      %s159 = sadd.s32 %s158, 1
      %s160 = scalar_select %p157, %s158, %s159
      %p163 = pneg %p157
      %p164 = scmp.eq.s32.totalorder %s17, 1
      %p165 = por %p163, %p164
      %p166 = scmp.ne.s32.totalorder %s158, %s161
      %p167 = scmp.eq.s32.totalorder %s17, 0
      %p168 = por %p166, %p167
      %p169 = scmp.ne.s32.totalorder %s158, %s161
      %p170 = scmp.eq.s32.totalorder %s22, 1
      %p171 = por %p169, %p170
      %p172 = scmp.ne.s32.totalorder %s161, %s162
      %p173 = scmp.eq.s32.totalorder %s22, 0
      %p174 = por %p172, %p173
      %p175 = scmp.ne.s32.totalorder %s161, %s162
      %p176 = scmp.eq.s32.totalorder %s23, 1
      %p177 = por %p175, %p176
      %p179 = scmp.ne.s32.totalorder %s162, %s178
      %p180 = scmp.eq.s32.totalorder %s23, 0
      %p181 = por %p179, %p180
      %p182 = scmp.le.s32.totalorder 1, %s17
      %p183 = scmp.lt.s32.totalorder %s17, 3
      %p184 = pnand %p182, %p183
      %p185 = pneg %p184
      // Predicated region
      $region9: #{tpu_custom_call.1} parent=5 // pred_check
        _
      $region10: #{tpu_custom_call.1} parent=5 // pred_check_branch
        %187 = sbr.rel (%p184) target = $region12
      $region11: #{tpu_custom_call.1} parent=5 // pred_region
        %s188 = ssub.s32 %s17, 1
        // Predicated region
        $region13: #{tpu_custom_call.1} parent=11 // pred_check
          %p189 = pneg %p64
        $region14: #{tpu_custom_call.1} parent=11 // pred_check_branch
          %191 = sbr.rel (%p189) target = $region16
        $region15: #{tpu_custom_call.1} parent=11 // pred_region
          _
        $region16: #{tpu_custom_call.1} parent=11 // pred_fallthru
          _
        // Predicated region
        $region17: #{tpu_custom_call.1} parent=11 // pred_check
          %p192 = pneg %p85
        $region18: #{tpu_custom_call.1} parent=11 // pred_check_branch
          %194 = sbr.rel (%p192) target = $region20
        $region19: #{tpu_custom_call.1} parent=11 // pred_region
          %196 = vsyncadd [#allocation3], 0
          %s197 = sshll.u32 %s2, 4
          %s198 = int_to_ptr.hbm [resolvable:$true] %s197
          %s199 = sshll.u32 [#allocation2], 4
          %s200 = int_to_ptr.vmem [resolvable:$true] %s199
          %205 = dma.hbm_to_vmem [thread:$0]  %s198, 512, %s200, [#allocation3], 64, 64, 4
        $region20: #{tpu_custom_call.1} parent=11 // pred_fallthru
          _
        // Predicated region
        $region21: #{tpu_custom_call.1} parent=11 // pred_check
          %p206 = pneg %p106
        $region22: #{tpu_custom_call.1} parent=11 // pred_check_branch
          %208 = sbr.rel (%p206) target = $region24
        $region23: #{tpu_custom_call.1} parent=11 // pred_region
          _
        $region24: #{tpu_custom_call.1} parent=11 // pred_fallthru
          _
        // Predicated region
        $region25: #{tpu_custom_call.1} parent=11 // pred_check
          %p209 = pneg %p127
        $region26: #{tpu_custom_call.1} parent=11 // pred_check_branch
          %211 = sbr.rel (%p209) target = $region28
        $region27: #{tpu_custom_call.1} parent=11 // pred_region
          %213 = vsyncadd [#allocation6], 0
          %s214 = sshll.u32 %s4, 4
          %s215 = int_to_ptr.hbm [resolvable:$true] %s214
          %s216 = sshll.u32 [#allocation5], 4
          %s217 = int_to_ptr.vmem [resolvable:$true] %s216
          %222 = dma.hbm_to_vmem [thread:$0]  %s215, 1024, %s217, [#allocation6], 64, 64, 4
        $region28: #{tpu_custom_call.1} parent=11 // pred_fallthru
          _
        // Predicated region
        $region29: #{tpu_custom_call.1} parent=11 // pred_check
          %p223 = pneg %p148
        $region30: #{tpu_custom_call.1} parent=11 // pred_check_branch
          %225 = sbr.rel (%p223) target = $region32
        $region31: #{tpu_custom_call.1} parent=11 // pred_region
          _
        $region32: #{tpu_custom_call.1} parent=11 // pred_fallthru
          _
      $region12: #{tpu_custom_call.1} parent=5 // pred_fallthru
        _
      %p226 = scmp.lt.s32.totalorder %s17, 2
      // Predicated region
      $region33: #{tpu_custom_call.1} parent=5 // pred_check
        %p227 = pneg %p226
      $region34: #{tpu_custom_call.1} parent=5 // pred_check_branch
        %229 = sbr.rel (%p227) target = $region36
      $region35: #{tpu_custom_call.1} parent=5 // pred_region
        // Predicated region
        $region37: #{tpu_custom_call.1} parent=35 // pred_check
          %p230 = pneg %p37
        $region38: #{tpu_custom_call.1} parent=35 // pred_check_branch
          %232 = sbr.rel (%p230) target = $region40
        $region39: #{tpu_custom_call.1} parent=35 // pred_region
          %p233 = scmp.lt.s32.totalorder %s17, 1
          %s234 = scalar_select %p233, %s17, 1
          %s235 = smul.addr %s234, 8
          %s236 = scalar_lea.vmem %s0, %s235
        $region40: #{tpu_custom_call.1} parent=35 // pred_fallthru
          _
      $region36: #{tpu_custom_call.1} parent=5 // pred_fallthru
        _
      %p237 = scmp.le.s32.totalorder 1, %s17
      %p238 = scmp.lt.s32.totalorder %s17, 3
      %p239 = pnand %p237, %p238
      %p240 = pneg %p239
      // Predicated region
      $region41: #{tpu_custom_call.1} parent=5 // pred_check
        _
      $region42: #{tpu_custom_call.1} parent=5 // pred_check_branch
        %242 = sbr.rel (%p239) target = $region44
      $region43: #{tpu_custom_call.1} parent=5 // pred_region
        %s243 = ssub.s32 %s17, 1
        // Predicated region
        $region45: #{tpu_custom_call.1} parent=43 // pred_check
          %p244 = pneg %p85
        $region46: #{tpu_custom_call.1} parent=43 // pred_check_branch
          %246 = sbr.rel (%p244) target = $region48
        $region47: #{tpu_custom_call.1} parent=43 // pred_region
          %248 = dma.done [#allocation3], 512
        $region48: #{tpu_custom_call.1} parent=43 // pred_fallthru
          _
        // Predicated region
        $region49: #{tpu_custom_call.1} parent=43 // pred_check
          %p249 = pneg %p127
        $region50: #{tpu_custom_call.1} parent=43 // pred_check_branch
          %251 = sbr.rel (%p249) target = $region52
        $region51: #{tpu_custom_call.1} parent=43 // pred_region
          %253 = dma.done [#allocation6], 1024
        $region52: #{tpu_custom_call.1} parent=43 // pred_fallthru
          _
        %p254 = scmp.lt.s32.totalorder %s22, 1
        %s255 = scalar_select %p254, %s22, 1
        %s256 = smul.addr %s255, 8
        %s257 = scalar_lea.vmem %s0, %s256
        %p258 = pneg %p43
        %p259 = pneg %p40
        %p260 = pneg %p64
        %p261 = pneg %p61
        %p262 = pneg %p85
        %p263 = pneg %p82
        %p264 = pneg %p106
        %p265 = pneg %p103
        %p266 = pneg %p127
        %p267 = pneg %p124
        %p268 = pneg %p148
        %p269 = pneg %p145
        %p270 = pneg %p174
        %p271 = pneg %p171
        %s272 = sand.u32 %s161, 1
        %s273 = scalar_lea.sflag [#allocation4], %s272
        %s274 = sand.u32 %s161, 1
        %s275 = smul.addr %s274, 8
        %s276 = scalar_lea.vmem [#allocation7], %s275
        %p277 = scmp.lt.s32.totalorder %s22, 1
        %s278 = scalar_select %p277, %s22, 1
        %s279 = smul.addr %s278, 8
        %s280 = scalar_lea.vmem %s0, %s279
        %v282 = vld [vmem:[%s280] sm:$0xff]
        %v283 = vld [vmem:[%s1] sm:$0x1]
        %285 = vset.pattern.permute.xlu0 0
        %286 = vperm.xlu0 %285, %v282
        %v287 = vpop.permute.xlu0 %286
        %v290 = vperm.slane %v283, 0
        %v292 = vmul.f32 %v287, %v290
        %v293 = vlaneseq
        %v294 = vand.u32 %v293, 127
        %vm295 = vcmp.lt.s32.totalorder %v294, 32
        %v296 = vand.u32 2147483647, %v292
        %vm297 = vcmp.le.f32.partialorder %v296, 0.7853982
        %vm298 = vcmp.lt.s32.totalorder %v292, 0
        %v299 = vand.u32 %v292, 2139095040
        %v300 = vshrl.u32 %v299, 23
        %v301 = vsub.s32 %v300, 127
        %v302 = vand.u32 2147483647, %v292
        %v303 = vand.u32 %v302, 8388607
        %v304 = vor.u32 %v303, 8388608
        %v305 = vsub.s32 0, %v304
        %v306 = vadd.s32 %v301, 1
        %vm307 = vcmp.gt.s32.totalorder %v306, 0
        %v308 = vsel %vm307, %v306, 0
        %v309 = vshrl.u32 %v308, 5
        %v310 = vand.u32 %v308, 31
        %v311 = vsub.s32 32, %v310
        %v312 = vshrl.u32 683565275, %v311
        %v313 = vshll.u32 683565275, %v310
        %v314 = vshrl.u32 2475754826, %v311
        %v315 = vor.u32 %v313, %v314
        %v316 = vshll.u32 2475754826, %v310
        %v317 = vshrl.u32 2131351028, %v311
        %v318 = vor.u32 %v316, %v317
        %v319 = vshll.u32 2131351028, %v310
        %v320 = vshrl.u32 2102212464, %v311
        %v321 = vor.u32 %v319, %v320
        %v322 = vshll.u32 2102212464, %v310
        %v323 = vshrl.u32 920167782, %v311
        %v324 = vor.u32 %v322, %v323
        %v325 = vshll.u32 920167782, %v310
        %v326 = vshrl.u32 1326507024, %v311
        %v327 = vor.u32 %v325, %v326
        %vm328 = vcmp.lt.s32.totalorder %v309, 1
        %vm329 = vcmp.lt.s32.totalorder %v309, 2
        %vm330 = vcmp.lt.s32.totalorder %v309, 3
        %vm331 = vcmp.lt.s32.totalorder %v309, 4
        %v332 = vsel %vm328, %v312, %v315
        %v333 = vsel %vm331, %v321, 2102212464
        %v334 = vsel %vm330, %v318, %v333
        %v335 = vsel %vm329, %v332, %v334
        %v336 = vsel %vm328, %v315, %v318
        %v337 = vsel %vm331, %v324, 920167782
        %v338 = vsel %vm330, %v321, %v337
        %v339 = vsel %vm329, %v336, %v338
        %v340 = vsel %vm328, %v318, %v321
        %v341 = vsel %vm331, %v327, 1326507024
        %v342 = vsel %vm330, %v324, %v341
        %v343 = vsel %vm329, %v340, %v342
        %v344 = vshll.u32 %v304, 8
        %v345 = vand.u32 %v344, 65535
        %v346 = vshrl.u32 %v344, 16
        %v347 = vand.u32 %v343, 65535
        %v348 = vshrl.u32 %v343, 16
        %v349 = vmul.u32 %v345, %v347
        %v350 = vmul.u32 %v345, %v348
        %v351 = vmul.u32 %v346, %v347
        %v352 = vmul.u32 %v346, %v348
        %v353 = vshll.u32 %v350, 16
        %v354 = vshrl.u32 %v350, 16
        %v355 = vshll.u32 %v351, 16
        %v356 = vshrl.u32 %v351, 16
        %vm357 = vc.u32 %v349, %v353
        %v358 = vsel %vm357, 1, 0
        %v359 = vadd.s32 %v349, %v353
        %v360 = vadd.s32 %v352, %v358
        %vm361 = vc.u32 %v359, %v355
        %v362 = vsel %vm361, 1, 0
        %v363 = vadd.s32 %v359, %v355
        %v364 = vadd.s32 %v360, %v362
        %v365 = vadd.s32 %v364, %v354
        %v366 = vadd.s32 %v365, %v356
        %v367 = vand.u32 %v344, 65535
        %v368 = vshrl.u32 %v344, 16
        %v369 = vand.u32 %v339, 65535
        %v370 = vshrl.u32 %v339, 16
        %v371 = vmul.u32 %v367, %v369
        %v372 = vmul.u32 %v367, %v370
        %v373 = vmul.u32 %v368, %v369
        %v374 = vmul.u32 %v368, %v370
        %v375 = vshll.u32 %v372, 16
        %v376 = vshrl.u32 %v372, 16
        %v377 = vshll.u32 %v373, 16
        %v378 = vshrl.u32 %v373, 16
        %vm379 = vc.u32 %v371, %v375
        %v380 = vsel %vm379, 1, 0
        %v381 = vadd.s32 %v371, %v375
        %v382 = vadd.s32 %v374, %v380
        %vm383 = vc.u32 %v381, %v377
        %v384 = vsel %vm383, 1, 0
        %v385 = vadd.s32 %v381, %v377
        %v386 = vadd.s32 %v382, %v384
        %v387 = vadd.s32 %v386, %v376
        %v388 = vadd.s32 %v387, %v378
        %v389 = vmul.u32 %v344, %v335
        %v390 = vadd.s32 %v366, %v385
        %vm391 = vc.u32 %v366, %v385
        %v392 = vadd.s32 %v388, 1
        %v393 = vsel %vm391, %v392, %v388
        %v394 = vadd.s32 %v389, %v393
        %v395 = vadd.s32 %v394, 536870912
        %v396 = vshrl.u32 %v395, 30
        %v397 = vshll.u32 %v396, 30
        %v398 = vsub.s32 %v394, %v397
        %vm399 = vcmp.lt.s32.totalorder %v398, 0
        %v400 = vsub.s32 0, %v398
        %v401 = vsel %vm399, %v400, %v398
        %v402 = vclz %v401
        %v403 = vsub.s32 %v402, 2
        %vm404 = vcmp.gt.s32.totalorder 0, %v403
        %v405 = vsel %vm404, 0, %v403
        %v406 = vsub.s32 32, %v405
        %v407 = vshll.u32 %v398, %v405
        %v408 = vshrl.u32 %v390, %v406
        %v409 = vor.u32 %v407, %v408
        %v410 = vsub.s32 4294967266, %v405
        %v411 = vadd.s32 %v410, 127
        %v412 = vshll.u32 %v411, 23
        %v413 = vor.u32 4788187, %v412
        %v414 = vand.u32 2147483647, %v413
        %v416 = vcvt.s32.f32 %v409
        %v417 = vmul.f32 %v416, %v414
        %v418 = vxor.u32 %v417, 2147483648
        %v419 = vsel %vm298, %v418, %v417
        %v420 = vsub.s32 4, %v396
        %v421 = vsel %vm298, %v420, %v396
        %v422 = vsel %vm297, %v292, %v419
        %v423 = vsel %vm297, 0, %v421
        %v424 = vmul.f32 %v422, %v422
        %v425 = vmul.f32 %v424, -0.001358992
        %v426 = vadd.f32 %v425, 0.041655596
        %v427 = vmul.f32 %v424, %v426
        %v428 = vadd.f32 %v427, -0.4999988
        %v429 = vmul.f32 %v424, %v428
        %v430 = vadd.f32 1.0, %v429
        %v431 = vmul.f32 %v422, %v422
        %v432 = vmul.f32 %v431, -0.00019511016
        %v433 = vadd.f32 %v432, 0.008332121
        %v434 = vmul.f32 %v431, %v433
        %v435 = vadd.f32 %v434, -0.16666654
        %v436 = vmul.f32 %v431, %v435
        %v437 = vadd.f32 %v436, 1.0
        %v438 = vmul.f32 %v437, %v422
        %vm439 = vweird.f32 %v292
        %v440 = vand.u32 %v423, 3
        %vm441 = vcmp.lt.s32.totalorder %v440, 2
        %vm442 = vcmp.eq.s32.totalorder %v440, 0
        %v443 = vxor.u32 %v438, 2147483648
        %v444 = vsel %vm442, %v430, %v443
        %vm445 = vcmp.eq.s32.totalorder %v440, 2
        %v446 = vxor.u32 %v430, 2147483648
        %v447 = vsel %vm445, %v446, %v438
        %v448 = vsel %vm441, %v444, %v447
        %v449 = vsel %vm439, nan, %v448
        %v450 = vand.u32 2147483647, %v292
        %vm451 = vcmp.le.f32.partialorder %v450, 0.7853982
        %vm452 = vcmp.lt.s32.totalorder %v292, 0
        %v453 = vand.u32 %v292, 2139095040
        %v454 = vshrl.u32 %v453, 23
        %v455 = vsub.s32 %v454, 127
        %v456 = vand.u32 2147483647, %v292
        %v457 = vand.u32 %v456, 8388607
        %v458 = vor.u32 %v457, 8388608
        %v459 = vsub.s32 0, %v458
        %v460 = vadd.s32 %v455, 1
        %vm461 = vcmp.gt.s32.totalorder %v460, 0
        %v462 = vsel %vm461, %v460, 0
        %v463 = vshrl.u32 %v462, 5
        %v464 = vand.u32 %v462, 31
        %v465 = vsub.s32 32, %v464
        %v466 = vshrl.u32 683565275, %v465
        %v467 = vshll.u32 683565275, %v464
        %v468 = vshrl.u32 2475754826, %v465
        %v469 = vor.u32 %v467, %v468
        %v470 = vshll.u32 2475754826, %v464
        %v471 = vshrl.u32 2131351028, %v465
        %v472 = vor.u32 %v470, %v471
        %v473 = vshll.u32 2131351028, %v464
        %v474 = vshrl.u32 2102212464, %v465
        %v475 = vor.u32 %v473, %v474
        %v476 = vshll.u32 2102212464, %v464
        %v477 = vshrl.u32 920167782, %v465
        %v478 = vor.u32 %v476, %v477
        %v479 = vshll.u32 920167782, %v464
        %v480 = vshrl.u32 1326507024, %v465
        %v481 = vor.u32 %v479, %v480
        %vm482 = vcmp.lt.s32.totalorder %v463, 1
        %vm483 = vcmp.lt.s32.totalorder %v463, 2
        %vm484 = vcmp.lt.s32.totalorder %v463, 3
        %vm485 = vcmp.lt.s32.totalorder %v463, 4
        %v486 = vsel %vm482, %v466, %v469
        %v487 = vsel %vm485, %v475, 2102212464
        %v488 = vsel %vm484, %v472, %v487
        %v489 = vsel %vm483, %v486, %v488
        %v490 = vsel %vm482, %v469, %v472
        %v491 = vsel %vm485, %v478, 920167782
        %v492 = vsel %vm484, %v475, %v491
        %v493 = vsel %vm483, %v490, %v492
        %v494 = vsel %vm482, %v472, %v475
        %v495 = vsel %vm485, %v481, 1326507024
        %v496 = vsel %vm484, %v478, %v495
        %v497 = vsel %vm483, %v494, %v496
        %v498 = vshll.u32 %v458, 8
        %v499 = vand.u32 %v498, 65535
        %v500 = vshrl.u32 %v498, 16
        %v501 = vand.u32 %v497, 65535
        %v502 = vshrl.u32 %v497, 16
        %v503 = vmul.u32 %v499, %v501
        %v504 = vmul.u32 %v499, %v502
        %v505 = vmul.u32 %v500, %v501
        %v506 = vmul.u32 %v500, %v502
        %v507 = vshll.u32 %v504, 16
        %v508 = vshrl.u32 %v504, 16
        %v509 = vshll.u32 %v505, 16
        %v510 = vshrl.u32 %v505, 16
        %vm511 = vc.u32 %v503, %v507
        %v512 = vsel %vm511, 1, 0
        %v513 = vadd.s32 %v503, %v507
        %v514 = vadd.s32 %v506, %v512
        %vm515 = vc.u32 %v513, %v509
        %v516 = vsel %vm515, 1, 0
        %v517 = vadd.s32 %v513, %v509
        %v518 = vadd.s32 %v514, %v516
        %v519 = vadd.s32 %v518, %v508
        %v520 = vadd.s32 %v519, %v510
        %v521 = vand.u32 %v498, 65535
        %v522 = vshrl.u32 %v498, 16
        %v523 = vand.u32 %v493, 65535
        %v524 = vshrl.u32 %v493, 16
        %v525 = vmul.u32 %v521, %v523
        %v526 = vmul.u32 %v521, %v524
        %v527 = vmul.u32 %v522, %v523
        %v528 = vmul.u32 %v522, %v524
        %v529 = vshll.u32 %v526, 16
        %v530 = vshrl.u32 %v526, 16
        %v531 = vshll.u32 %v527, 16
        %v532 = vshrl.u32 %v527, 16
        %vm533 = vc.u32 %v525, %v529
        %v534 = vsel %vm533, 1, 0
        %v535 = vadd.s32 %v525, %v529
        %v536 = vadd.s32 %v528, %v534
        %vm537 = vc.u32 %v535, %v531
        %v538 = vsel %vm537, 1, 0
        %v539 = vadd.s32 %v535, %v531
        %v540 = vadd.s32 %v536, %v538
        %v541 = vadd.s32 %v540, %v530
        %v542 = vadd.s32 %v541, %v532
        %v543 = vmul.u32 %v498, %v489
        %v544 = vadd.s32 %v520, %v539
        %vm545 = vc.u32 %v520, %v539
        %v546 = vadd.s32 %v542, 1
        %v547 = vsel %vm545, %v546, %v542
        %v548 = vadd.s32 %v543, %v547
        %v549 = vadd.s32 %v548, 536870912
        %v550 = vshrl.u32 %v549, 30
        %v551 = vshll.u32 %v550, 30
        %v552 = vsub.s32 %v548, %v551
        %vm553 = vcmp.lt.s32.totalorder %v552, 0
        %v554 = vsub.s32 0, %v552
        %v555 = vsel %vm553, %v554, %v552
        %v556 = vclz %v555
        %v557 = vsub.s32 %v556, 2
        %vm558 = vcmp.gt.s32.totalorder 0, %v557
        %v559 = vsel %vm558, 0, %v557
        %v560 = vsub.s32 32, %v559
        %v561 = vshll.u32 %v552, %v559
        %v562 = vshrl.u32 %v544, %v560
        %v563 = vor.u32 %v561, %v562
        %v564 = vsub.s32 4294967266, %v559
        %v565 = vadd.s32 %v564, 127
        %v566 = vshll.u32 %v565, 23
        %v567 = vor.u32 4788187, %v566
        %v568 = vand.u32 2147483647, %v567
        %v570 = vcvt.s32.f32 %v563
        %v571 = vmul.f32 %v570, %v568
        %v572 = vxor.u32 %v571, 2147483648
        %v573 = vsel %vm452, %v572, %v571
        %v574 = vsub.s32 4, %v550
        %v575 = vsel %vm452, %v574, %v550
        %v576 = vsel %vm451, %v292, %v573
        %v577 = vsel %vm451, 0, %v575
        %v578 = vmul.f32 %v576, %v576
        %v579 = vmul.f32 %v578, -0.001358992
        %v580 = vadd.f32 %v579, 0.041655596
        %v581 = vmul.f32 %v578, %v580
        %v582 = vadd.f32 %v581, -0.4999988
        %v583 = vmul.f32 %v578, %v582
        %v584 = vadd.f32 1.0, %v583
        %v585 = vmul.f32 %v576, %v576
        %v586 = vmul.f32 %v585, -0.00019511016
        %v587 = vadd.f32 %v586, 0.008332121
        %v588 = vmul.f32 %v585, %v587
        %v589 = vadd.f32 %v588, -0.16666654
        %v590 = vmul.f32 %v585, %v589
        %v591 = vadd.f32 %v590, 1.0
        %v592 = vmul.f32 %v591, %v576
        %vm593 = vweird.f32 %v292
        %v594 = vadd.s32 %v577, 3
        %v595 = vand.u32 %v594, 3
        %vm596 = vcmp.lt.s32.totalorder %v595, 2
        %vm597 = vcmp.eq.s32.totalorder %v595, 0
        %v598 = vxor.u32 %v592, 2147483648
        %v599 = vsel %vm597, %v584, %v598
        %vm600 = vcmp.eq.s32.totalorder %v595, 2
        %v601 = vxor.u32 %v584, 2147483648
        %v602 = vsel %vm600, %v601, %v592
        %v603 = vsel %vm596, %v599, %v602
        %v604 = vsel %vm593, nan, %v603
        %v605 = vsel %vm295, %v449, %v604
        %v606 = vpack.c.bf16 %v605, %v605
        %v607 = vld [vmem:[#allocation2] sm:$0xf]
        %v608 = vld [vmem:[#allocation2 + $0x4] sm:$0xf]
        %v609 = vld [vmem:[#allocation2 + $0x8] sm:$0xf]
        %v610 = vld [vmem:[#allocation2 + $0xc] sm:$0xf]
        %v611 = vld [vmem:[#allocation2 + $0x10] sm:$0xf]
        %v612 = vld [vmem:[#allocation2 + $0x14] sm:$0xf]
        %v613 = vld [vmem:[#allocation2 + $0x18] sm:$0xf]
        %v614 = vld [vmem:[#allocation2 + $0x1c] sm:$0xf]
        %v615 = vld [vmem:[%s3] sm:$0x1]
        %v617 = vperm.slane %v615, 0
        %v627 = vunpack.c.l.b16 %v607
        %v628 = vunpack.c.l.b16 %v608
        %v629 = vunpack.c.l.b16 %v609
        %v630 = vunpack.c.l.b16 %v610
        %v631 = vunpack.c.l.b16 %v611
        %v632 = vunpack.c.l.b16 %v612
        %v633 = vunpack.c.l.b16 %v613
        %v634 = vunpack.c.l.b16 %v614
        %v635 = vpack.c.b16 %v628, %v627
        %v636 = vpack.c.b16 %v630, %v629
        %v637 = vpack.c.b16 %v632, %v631
        %v638 = vpack.c.b16 %v634, %v633
        %vm643 = vcmask 523264
        %v645 = vsel %vm643, %v606, 0
        %647 = vmatpush.bf16.msra.mxu0 0
        %648 = vmatpush.bf16.msra.mxu0 0
        %649 = vmatpush.bf16.msra.mxu0 0
        %650 = vmatpush.bf16.msra.mxu0 0
        %651 = vmatpush.bf16.msra.mxu0 %v638
        %652 = vmatpush.bf16.msra.mxu0 %v637
        %653 = vmatpush.bf16.msra.mxu0 %v636
        %654 = vmatpush.bf16.msra.mxu0 %v635
        %655 = vmatmul.bf16.gmra.mxu0 %v645
        %v656 = vpop.f32.mrf.mxu0
        %v657 = vadd.f32 %v617, %v656
        %v658 = vpop.f32.mrf.mxu0
        %659 = vdwg.mxu0
        %v660 = vsub.f32 0.0, %v657
        %v661 = vmul.f32 %v660, 1.442695
        %v662 = vpow.pop %v661
        %v663 = vadd.f32 %v662, 1.0
        %v664 = vrcp.pop %v663
        %v665 = vmul.f32 %v657, %v664
        %v666 = vpack.c.bf16 %v665, %v665
        %v667 = vld [vmem:[#allocation5] sm:$0xf]
        %v668 = vld [vmem:[#allocation5 + $0x4] sm:$0xf]
        %v669 = vld [vmem:[#allocation5 + $0x8] sm:$0xf]
        %v670 = vld [vmem:[#allocation5 + $0xc] sm:$0xf]
        %v671 = vld [vmem:[#allocation5 + $0x10] sm:$0xf]
        %v672 = vld [vmem:[#allocation5 + $0x14] sm:$0xf]
        %v673 = vld [vmem:[#allocation5 + $0x18] sm:$0xf]
        %v674 = vld [vmem:[#allocation5 + $0x1c] sm:$0xf]
        %v675 = vld [vmem:[#allocation5 + $0x20] sm:$0xf]
        %v676 = vld [vmem:[#allocation5 + $0x24] sm:$0xf]
        %v677 = vld [vmem:[#allocation5 + $0x28] sm:$0xf]
        %v678 = vld [vmem:[#allocation5 + $0x2c] sm:$0xf]
        %v679 = vld [vmem:[#allocation5 + $0x30] sm:$0xf]
        %v680 = vld [vmem:[#allocation5 + $0x34] sm:$0xf]
        %v681 = vld [vmem:[#allocation5 + $0x38] sm:$0xf]
        %v682 = vld [vmem:[#allocation5 + $0x3c] sm:$0xf]
        %v683 = vld [vmem:[%s5] sm:$0x1]
        %v685 = vperm.slane %v683, 0
        %v703 = vunpack.c.l.b16 %v667
        %v704 = vunpack.c.l.b16 %v668
        %v705 = vunpack.c.l.b16 %v669
        %v706 = vunpack.c.l.b16 %v670
        %v707 = vunpack.c.l.b16 %v671
        %v708 = vunpack.c.l.b16 %v672
        %v709 = vunpack.c.l.b16 %v673
        %v710 = vunpack.c.l.b16 %v674
        %v711 = vunpack.c.l.b16 %v675
        %v712 = vunpack.c.l.b16 %v676
        %v713 = vunpack.c.l.b16 %v677
        %v714 = vunpack.c.l.b16 %v678
        %v715 = vunpack.c.l.b16 %v679
        %v716 = vunpack.c.l.b16 %v680
        %v717 = vunpack.c.l.b16 %v681
        %v718 = vunpack.c.l.b16 %v682
        %v719 = vpack.c.b16 %v704, %v703
        %v720 = vpack.c.b16 %v706, %v705
        %v721 = vpack.c.b16 %v708, %v707
        %v722 = vpack.c.b16 %v710, %v709
        %v723 = vpack.c.b16 %v712, %v711
        %v724 = vpack.c.b16 %v714, %v713
        %v725 = vpack.c.b16 %v716, %v715
        %v726 = vpack.c.b16 %v718, %v717
        %735 = vmatpush.bf16.msra.mxu0 %v726
        %736 = vmatpush.bf16.msra.mxu0 %v725
        %737 = vmatpush.bf16.msra.mxu0 %v724
        %738 = vmatpush.bf16.msra.mxu0 %v723
        %739 = vmatpush.bf16.msra.mxu0 %v722
        %740 = vmatpush.bf16.msra.mxu0 %v721
        %741 = vmatpush.bf16.msra.mxu0 %v720
        %742 = vmatpush.bf16.msra.mxu0 %v719
        %743 = vmatmul.bf16.gmra.mxu0 %v666
        %v744 = vpop.f32.mrf.mxu0
        %v745 = vadd.f32 %v685, %v744
        %v746 = vpop.f32.mrf.mxu0
        %747 = vdwg.mxu0
        %v748 = vsub.f32 0.0, %v745
        %v749 = vmul.f32 %v748, 1.442695
        %v750 = vpow.pop %v749
        %v751 = vadd.f32 %v750, 1.0
        %v752 = vrcp.pop %v751
        %v753 = vmul.f32 %v745, %v752
        %754 = vst [vmem:[%s276] sm:$0xff] %v753
        %s755 = sand.u32 %s161, 1
        %s756 = scalar_lea.sflag [#allocation4], %s755
        %s757 = sand.u32 %s161, 1
        %s758 = smul.addr %s757, 8
        %s759 = scalar_lea.vmem [#allocation7], %s758
        // Predicated region
        $region53: #{tpu_custom_call.1} parent=43 // pred_check
          %p760 = pneg %p171
        $region54: #{tpu_custom_call.1} parent=43 // pred_check_branch
          %762 = sbr.rel (%p760) target = $region56
        $region55: #{tpu_custom_call.1} parent=43 // pred_region
          %764 = vsyncadd %s756, 0
          %s765 = smul.addr %s22, 8
          %s766 = scalar_lea.hbm %s6, %s765
          %s768 = sshll.u32 %s759, 4
          %s769 = int_to_ptr.vmem [resolvable:$true] %s768
          %s770 = sshll.u32 %s766, 4
          %s771 = int_to_ptr.hbm [resolvable:$true] %s770
          %773 = dma.vmem_to_hbm [thread:$0]  %s769, 128, %s771, %s756
        $region56: #{tpu_custom_call.1} parent=43 // pred_fallthru
          _
      $region44: #{tpu_custom_call.1} parent=5 // pred_fallthru
        _
      %p774 = scmp.le.s32.totalorder 2, %s17
      // Predicated region
      $region57: #{tpu_custom_call.1} parent=5 // pred_check
        %p775 = pneg %p774
      $region58: #{tpu_custom_call.1} parent=5 // pred_check_branch
        %777 = sbr.rel (%p775) target = $region60
      $region59: #{tpu_custom_call.1} parent=5 // pred_region
        %s778 = ssub.s32 %s17, 2
        // Predicated region
        $region61: #{tpu_custom_call.1} parent=59 // pred_check
          %p779 = pneg %p177
        $region62: #{tpu_custom_call.1} parent=59 // pred_check_branch
          %781 = sbr.rel (%p779) target = $region64
        $region63: #{tpu_custom_call.1} parent=59 // pred_region
          %s782 = sand.u32 %s162, 1
          %s783 = scalar_lea.sflag [#allocation4], %s782
          %s784 = sand.u32 %s162, 1
          %s785 = smul.addr %s784, 8
          %s786 = scalar_lea.vmem [#allocation7], %s785
          %788 = dma.done %s783, 128
        $region64: #{tpu_custom_call.1} parent=59 // pred_fallthru
          _
      $region60: #{tpu_custom_call.1} parent=5 // pred_fallthru
        _
    $region6: #{tpu_custom_call.1} parent=1 // loop_footer
      %s21 = sadd.s32 1, %s17
    $region7: #{tpu_custom_call.1} parent=1 // loop_footer_branch
      %16 = sbr.rel target = $region3
    $region8: #{tpu_custom_call.1} parent=1 // loop_exit
      _
    %789 = vsyncpa [#allocation3], 1
    %s790 = scalar_lea.sflag [#allocation3], 1
    %791 = vsyncpa %s790, 1
    %792 = vsyncpa [#allocation6], 1
    %793 = vsyncpa [#allocation4], 1
    %s794 = scalar_lea.sflag [#allocation4], 1
    %795 = vsyncpa %s794, 1

</llo_original>
